<compile_context>
chip_gen: v7x
topology: tpu7x:2x2x1
jax: 0.10.0
libtpu: 0.0.40
codegen_flags: <defaults>
</compile_context>

<pallas_src>
import jax
import jax.numpy as jnp
from jax import lax
from jax.experimental import pallas as pl
from jax.experimental.pallas import tpu as pltpu


def _round_up(x, m):
    return ((x + m - 1) // m) * m


def _classifier_kernel(ids_ref, mask_ref, emb_ref, wp_ref, bp_ref,
                       w1_ref, b1_ref, w2_ref, b2_ref, out_ref):
    """Fused: masked-mean token pooling -> pooler dense+tanh -> dropout(id)
    -> linear1+tanh -> embed, for one batch tile.

    ids_ref : (TB, S)  int32   token ids for this batch tile
    mask_ref: (TB, S)  float32 attention mask (0/1); zero rows = batch padding
    emb_ref : (Vp, Hp) bf16    token-embedding table (zero-padded)
    wp_ref  : (Hp, Hp) bf16    pooler dense weight (in, out)
    bp_ref  : (1, Hp)  f32
    w1_ref  : (Hp, Op) bf16    linear1 weight (in, out)
    b1_ref  : (1, Op)  f32
    w2_ref  : (Op, Hp) bf16    embed weight (in, out)
    b2_ref  : (1, Hp)  f32
    out_ref : (TB, Hp) f32
    """
    tb, seq = ids_ref.shape
    vp = emb_ref.shape[0]

    ids = ids_ref[...]            # (TB, S) int32
    mask = mask_ref[...]          # (TB, S) f32

    # Mask-weighted vocabulary counts (TB, Vp): one lane-column per vocab id.
    vocab_iota = lax.broadcasted_iota(jnp.int32, (tb, vp), 1)
    wcount = jnp.zeros((tb, vp), jnp.float32)
    for s in range(seq):          # static, small trip count
        hit = (ids[:, s:s + 1] == vocab_iota).astype(jnp.float32)
        wcount = wcount + hit * mask[:, s:s + 1]

    denom = jnp.maximum(jnp.sum(mask, axis=1, keepdims=True), 1.0)   # (TB, 1)

    # Masked-mean token embedding via one-hot matmul on the MXU.
    x = jnp.dot(wcount.astype(jnp.bfloat16), emb_ref[...],
                preferred_element_type=jnp.float32) / denom          # (TB, Hp)

    # BERT-style pooler: tanh(dense(x)); tanh kept on the f32 accumulator (EUP).
    pooled = jnp.tanh(
        jnp.dot(x.astype(jnp.bfloat16), wp_ref[...],
                preferred_element_type=jnp.float32) + bp_ref[...])

    # dropout(hidden_dropout_prob) -> identity at inference time
    # TODO(synk): training-mode dropout (random mask + 1/(1-p) scaling) not implemented.

    # linear_output1 = tanh(linear1(pooled))
    h1 = jnp.tanh(
        jnp.dot(pooled.astype(jnp.bfloat16), w1_ref[...],
                preferred_element_type=jnp.float32) + b1_ref[...])

    # embeddings = embed(linear_output1)
    out = jnp.dot(h1.astype(jnp.bfloat16), w2_ref[...],
                  preferred_element_type=jnp.float32) + b2_ref[...]
    out_ref[...] = out.astype(out_ref.dtype)


def bert_classifier_forward(input_ids, attention_mask, params, *, batch_tile=256):
    """Fused Pallas forward.  Returns (B, hidden_size) float32 embeddings."""
    _, hidden, _ = params["dims"]
    emb, wp, bp = params["emb_table"], params["wp"], params["bp"]
    w1, b1, w2, b2 = params["w1"], params["b1"], params["w2"], params["b2"]
    vp, hp = emb.shape
    op = w1.shape[1]

    B, S = input_ids.shape
    tb = min(batch_tile, _round_up(B, 8))     # rows per grid step
    Bp = _round_up(B, tb)                     # padded batch

    ids = jnp.zeros((Bp, S), jnp.int32).at[:B].set(input_ids.astype(jnp.int32))
    mask = jnp.zeros((Bp, S), jnp.float32).at[:B].set(
        attention_mask.astype(jnp.float32))

    def nbytes(a):
        return int(a.size) * a.dtype.itemsize

    cost = pl.CostEstimate(
        flops=2 * Bp * (vp * hp + hp * hp + hp * op + op * hp),
        transcendentals=Bp * (hp + op),
        bytes_accessed=(nbytes(ids) + nbytes(mask) + nbytes(emb) + nbytes(wp)
                        + nbytes(bp) + nbytes(w1) + nbytes(b1) + nbytes(w2)
                        + nbytes(b2) + Bp * hp * 4),
    )

    out = pl.pallas_call(
        _classifier_kernel,
        out_shape=jax.ShapeDtypeStruct((Bp, hp), jnp.float32),
        grid_spec=pl.GridSpec(
            grid=(Bp // tb,),
            in_specs=[
                pl.BlockSpec((tb, S), lambda i: (i, 0)),    # ids   (batch-tiled)
                pl.BlockSpec((tb, S), lambda i: (i, 0)),    # mask  (batch-tiled)
                pl.BlockSpec((vp, hp), lambda i: (0, 0)),   # emb table (resident)
                pl.BlockSpec((hp, hp), lambda i: (0, 0)),   # pooler W  (resident)
                pl.BlockSpec((1, hp), lambda i: (0, 0)),    # pooler b
                pl.BlockSpec((hp, op), lambda i: (0, 0)),   # linear1 W
                pl.BlockSpec((1, op), lambda i: (0, 0)),    # linear1 b
                pl.BlockSpec((op, hp), lambda i: (0, 0)),   # embed W
                pl.BlockSpec((1, hp), lambda i: (0, 0)),    # embed b
            ],
            out_specs=pl.BlockSpec((tb, hp), lambda i: (i, 0)),
        ),
        compiler_params=pltpu.CompilerParams(
            dimension_semantics=("parallel",)),   # megacore / v7x 2-TC sharding
        cost_estimate=cost,
    )(ids, mask, emb, wp, bp, w1, b1, w2, b2)

    return out[:B, :hidden]


def init_params(key, vocab_size, hidden_size, output_size):
    """Weights padded ONCE to 128-multiples; padding zero so it cannot leak."""
    vp = _round_up(vocab_size, 128)
    hp = _round_up(hidden_size, 128)
    op = _round_up(output_size, 128)
    ks = jax.random.split(key, 6)
    scale = 0.02

    def pad_weight(k, rows, cols, prows, pcols):
        w = scale * jax.random.normal(k, (rows, cols), jnp.float32)
        return (jnp.zeros((prows, pcols), jnp.float32)
                .at[:rows, :cols].set(w).astype(jnp.bfloat16))

    def pad_bias(k, n, pn, bscale):
        b = bscale * jax.random.normal(k, (1, n), jnp.float32)
        return jnp.zeros((1, pn), jnp.float32).at[:, :n].set(b)

    return {
        "dims": (vocab_size, hidden_size, output_size),
        "emb_table": pad_weight(ks[0], vocab_size, hidden_size, vp, hp),
        "wp": pad_weight(ks[1], hidden_size, hidden_size, hp, hp),
        "bp": jnp.zeros((1, hp), jnp.float32),
        "w1": pad_weight(ks[2], hidden_size, output_size, hp, op),
        "b1": pad_bias(ks[3], output_size, op, 0.01),
        "w2": pad_weight(ks[4], output_size, hidden_size, op, hp),
        "b2": pad_bias(ks[5], hidden_size, hp, 0.01),
    }


def _reference(input_ids, attention_mask, params):
    """Plain-JAX reference mirroring the kernel's bf16-operand / f32-acc math."""
    _, hidden, _ = params["dims"]
    emb = params["emb_table"].astype(jnp.float32)
    wp = params["wp"].astype(jnp.float32)
    w1 = params["w1"].astype(jnp.float32)
    w2 = params["w2"].astype(jnp.float32)
    bp, b1, b2 = params["bp"], params["b1"], params["b2"]

    tok = jnp.take(emb, input_ids, axis=0)                     # (B, S, Hp)
    m = attention_mask.astype(jnp.float32)[..., None]
    x = (tok * m).sum(axis=1) / jnp.maximum(m.sum(axis=1), 1.0)

    def bf16(a):
        return a.astype(jnp.bfloat16).astype(jnp.float32)

    pooled = jnp.tanh(bf16(x) @ wp + bp)
    h1 = jnp.tanh(bf16(pooled) @ w1 + b1)
    out = bf16(h1) @ w2 + b2
    return out[:, :hidden]


if __name__ == "__main__":
    key = jax.random.PRNGKey(0)
    batch, seq = 2, 8
    vocab_size, hidden_size, output_size = 100, 32, 16

    k_ids, k_params = jax.random.split(key)
    input_ids = jax.random.randint(k_ids, (batch, seq), 0, vocab_size,
                                   dtype=jnp.int32)
    attention_mask = jnp.ones((batch, seq), dtype=jnp.int32).at[1, 5:].set(0)

    params = init_params(k_params, vocab_size, hidden_size, output_size)

    out = bert_classifier_forward(input_ids, attention_mask, params)
    out = jax.block_until_ready(out)

    ref = _reference(input_ids, attention_mask, params)
    assert out.shape == (batch, hidden_size), out.shape
    assert jnp.allclose(out, ref, atol=1e-2, rtol=1e-2), (
        "mismatch vs reference, max abs err = "
        + str(float(jnp.max(jnp.abs(out - ref)))))

    print("KERNEL_OK")
</pallas_src>

<mosaic_0001>
module attributes {stable_mosaic.version = 11 : i64} {
  func.func @_classifier_kernel(%arg0: i32, %arg1: memref<8x8xi32, #tpu.memory_space<vmem>>, %arg2: memref<8x8xf32, #tpu.memory_space<vmem>>, %arg3: memref<128x128xbf16, #tpu.memory_space<vmem>>, %arg4: memref<128x128xbf16, #tpu.memory_space<vmem>>, %arg5: memref<1x128xf32, #tpu.memory_space<vmem>>, %arg6: memref<128x128xbf16, #tpu.memory_space<vmem>>, %arg7: memref<1x128xf32, #tpu.memory_space<vmem>>, %arg8: memref<128x128xbf16, #tpu.memory_space<vmem>>, %arg9: memref<1x128xf32, #tpu.memory_space<vmem>>, %arg10: memref<8x128xf32, #tpu.memory_space<vmem>>) attributes {dimension_semantics = [#tpu.dimension_semantics<parallel>], iteration_bounds = array<i64: 1>, scalar_prefetch = 0 : i64, scratch_operands = 0 : i64, tpu.core_type = #tpu.core_type<tc>, window_params = [{transform_indices = @transform_0, window_bounds = array<i64: 8, 8>}, {transform_indices = @transform_1, window_bounds = array<i64: 8, 8>}, {pipeline_mode = #tpu.pipeline_mode<synchronous>, transform_indices = @transform_2, window_bounds = array<i64: 128, 128>}, {pipeline_mode = #tpu.pipeline_mode<synchronous>, transform_indices = @transform_3, window_bounds = array<i64: 128, 128>}, {pipeline_mode = #tpu.pipeline_mode<synchronous>, transform_indices = @transform_4, window_bounds = array<i64: 1, 128>}, {pipeline_mode = #tpu.pipeline_mode<synchronous>, transform_indices = @transform_5, window_bounds = array<i64: 128, 128>}, {pipeline_mode = #tpu.pipeline_mode<synchronous>, transform_indices = @transform_6, window_bounds = array<i64: 1, 128>}, {pipeline_mode = #tpu.pipeline_mode<synchronous>, transform_indices = @transform_7, window_bounds = array<i64: 128, 128>}, {pipeline_mode = #tpu.pipeline_mode<synchronous>, transform_indices = @transform_8, window_bounds = array<i64: 1, 128>}, {transform_indices = @transform_9, window_bounds = array<i64: 8, 128>}]} {
    %c0 = arith.constant 0 : index
    %c0_0 = arith.constant 0 : index
    %0 = vector.load %arg1[%c0, %c0_0] : memref<8x8xi32, #tpu.memory_space<vmem>>, vector<8x8xi32>
    %c0_1 = arith.constant 0 : index
    %c0_2 = arith.constant 0 : index
    %1 = vector.load %arg2[%c0_1, %c0_2] : memref<8x8xf32, #tpu.memory_space<vmem>>, vector<8x8xf32>
    %2 = tpu.iota {dimensions = array<i32: 1>} : vector<8x128xi32>
    %cst = arith.constant 0.000000e+00 : f32
    %3 = vector.broadcast %cst : f32 to vector<8x128xf32>
    %4 = vector.extract_strided_slice %0 {offsets = [0, 0], sizes = [8, 1], strides = [1, 1]} : vector<8x8xi32> to vector<8x1xi32>
    %5 = vector.broadcast %4 : vector<8x1xi32> to vector<8x128xi32>
    %6 = arith.cmpi eq, %5, %2 : vector<8x128xi32>
    %7 = arith.extui %6 : vector<8x128xi1> to vector<8x128xi32>
    %8 = arith.sitofp %7 : vector<8x128xi32> to vector<8x128xf32>
    %9 = vector.extract_strided_slice %1 {offsets = [0, 0], sizes = [8, 1], strides = [1, 1]} : vector<8x8xf32> to vector<8x1xf32>
    %10 = vector.broadcast %9 : vector<8x1xf32> to vector<8x128xf32>
    %11 = arith.mulf %8, %10 : vector<8x128xf32>
    %12 = arith.addf %3, %11 : vector<8x128xf32>
    %13 = vector.extract_strided_slice %0 {offsets = [0, 1], sizes = [8, 1], strides = [1, 1]} : vector<8x8xi32> to vector<8x1xi32>
    %14 = vector.broadcast %13 : vector<8x1xi32> to vector<8x128xi32>
    %15 = arith.cmpi eq, %14, %2 : vector<8x128xi32>
    %16 = arith.extui %15 : vector<8x128xi1> to vector<8x128xi32>
    %17 = arith.sitofp %16 : vector<8x128xi32> to vector<8x128xf32>
    %18 = vector.extract_strided_slice %1 {offsets = [0, 1], sizes = [8, 1], strides = [1, 1]} : vector<8x8xf32> to vector<8x1xf32>
    %19 = vector.broadcast %18 : vector<8x1xf32> to vector<8x128xf32>
    %20 = arith.mulf %17, %19 : vector<8x128xf32>
    %21 = arith.addf %12, %20 : vector<8x128xf32>
    %22 = vector.extract_strided_slice %0 {offsets = [0, 2], sizes = [8, 1], strides = [1, 1]} : vector<8x8xi32> to vector<8x1xi32>
    %23 = vector.broadcast %22 : vector<8x1xi32> to vector<8x128xi32>
    %24 = arith.cmpi eq, %23, %2 : vector<8x128xi32>
    %25 = arith.extui %24 : vector<8x128xi1> to vector<8x128xi32>
    %26 = arith.sitofp %25 : vector<8x128xi32> to vector<8x128xf32>
    %27 = vector.extract_strided_slice %1 {offsets = [0, 2], sizes = [8, 1], strides = [1, 1]} : vector<8x8xf32> to vector<8x1xf32>
    %28 = vector.broadcast %27 : vector<8x1xf32> to vector<8x128xf32>
    %29 = arith.mulf %26, %28 : vector<8x128xf32>
    %30 = arith.addf %21, %29 : vector<8x128xf32>
    %31 = vector.extract_strided_slice %0 {offsets = [0, 3], sizes = [8, 1], strides = [1, 1]} : vector<8x8xi32> to vector<8x1xi32>
    %32 = vector.broadcast %31 : vector<8x1xi32> to vector<8x128xi32>
    %33 = arith.cmpi eq, %32, %2 : vector<8x128xi32>
    %34 = arith.extui %33 : vector<8x128xi1> to vector<8x128xi32>
    %35 = arith.sitofp %34 : vector<8x128xi32> to vector<8x128xf32>
    %36 = vector.extract_strided_slice %1 {offsets = [0, 3], sizes = [8, 1], strides = [1, 1]} : vector<8x8xf32> to vector<8x1xf32>
    %37 = vector.broadcast %36 : vector<8x1xf32> to vector<8x128xf32>
    %38 = arith.mulf %35, %37 : vector<8x128xf32>
    %39 = arith.addf %30, %38 : vector<8x128xf32>
    %40 = vector.extract_strided_slice %0 {offsets = [0, 4], sizes = [8, 1], strides = [1, 1]} : vector<8x8xi32> to vector<8x1xi32>
    %41 = vector.broadcast %40 : vector<8x1xi32> to vector<8x128xi32>
    %42 = arith.cmpi eq, %41, %2 : vector<8x128xi32>
    %43 = arith.extui %42 : vector<8x128xi1> to vector<8x128xi32>
    %44 = arith.sitofp %43 : vector<8x128xi32> to vector<8x128xf32>
    %45 = vector.extract_strided_slice %1 {offsets = [0, 4], sizes = [8, 1], strides = [1, 1]} : vector<8x8xf32> to vector<8x1xf32>
    %46 = vector.broadcast %45 : vector<8x1xf32> to vector<8x128xf32>
    %47 = arith.mulf %44, %46 : vector<8x128xf32>
    %48 = arith.addf %39, %47 : vector<8x128xf32>
    %49 = vector.extract_strided_slice %0 {offsets = [0, 5], sizes = [8, 1], strides = [1, 1]} : vector<8x8xi32> to vector<8x1xi32>
    %50 = vector.broadcast %49 : vector<8x1xi32> to vector<8x128xi32>
    %51 = arith.cmpi eq, %50, %2 : vector<8x128xi32>
    %52 = arith.extui %51 : vector<8x128xi1> to vector<8x128xi32>
    %53 = arith.sitofp %52 : vector<8x128xi32> to vector<8x128xf32>
    %54 = vector.extract_strided_slice %1 {offsets = [0, 5], sizes = [8, 1], strides = [1, 1]} : vector<8x8xf32> to vector<8x1xf32>
    %55 = vector.broadcast %54 : vector<8x1xf32> to vector<8x128xf32>
    %56 = arith.mulf %53, %55 : vector<8x128xf32>
    %57 = arith.addf %48, %56 : vector<8x128xf32>
    %58 = vector.extract_strided_slice %0 {offsets = [0, 6], sizes = [8, 1], strides = [1, 1]} : vector<8x8xi32> to vector<8x1xi32>
    %59 = vector.broadcast %58 : vector<8x1xi32> to vector<8x128xi32>
    %60 = arith.cmpi eq, %59, %2 : vector<8x128xi32>
    %61 = arith.extui %60 : vector<8x128xi1> to vector<8x128xi32>
    %62 = arith.sitofp %61 : vector<8x128xi32> to vector<8x128xf32>
    %63 = vector.extract_strided_slice %1 {offsets = [0, 6], sizes = [8, 1], strides = [1, 1]} : vector<8x8xf32> to vector<8x1xf32>
    %64 = vector.broadcast %63 : vector<8x1xf32> to vector<8x128xf32>
    %65 = arith.mulf %62, %64 : vector<8x128xf32>
    %66 = arith.addf %57, %65 : vector<8x128xf32>
    %67 = vector.extract_strided_slice %0 {offsets = [0, 7], sizes = [8, 1], strides = [1, 1]} : vector<8x8xi32> to vector<8x1xi32>
    %68 = vector.broadcast %67 : vector<8x1xi32> to vector<8x128xi32>
    %69 = arith.cmpi eq, %68, %2 : vector<8x128xi32>
    %70 = arith.extui %69 : vector<8x128xi1> to vector<8x128xi32>
    %71 = arith.sitofp %70 : vector<8x128xi32> to vector<8x128xf32>
    %72 = vector.extract_strided_slice %1 {offsets = [0, 7], sizes = [8, 1], strides = [1, 1]} : vector<8x8xf32> to vector<8x1xf32>
    %73 = vector.broadcast %72 : vector<8x1xf32> to vector<8x128xf32>
    %74 = arith.mulf %71, %73 : vector<8x128xf32>
    %75 = arith.addf %66, %74 : vector<8x128xf32>
    %cst_3 = arith.constant dense<0.000000e+00> : vector<8xf32>
    %76 = vector.multi_reduction <add>, %1, %cst_3 [1] : vector<8x8xf32> to vector<8xf32>
    %77 = vector.shape_cast %76 : vector<8xf32> to vector<8x1xf32>
    %cst_4 = arith.constant 1.000000e+00 : f32
    %78 = vector.broadcast %cst_4 : f32 to vector<8x1xf32>
    %79 = arith.maximumf %77, %78 : vector<8x1xf32>
    %80 = arith.truncf %75 : vector<8x128xf32> to vector<8x128xbf16>
    %c0_5 = arith.constant 0 : index
    %c0_6 = arith.constant 0 : index
    %81 = vector.load %arg3[%c0_5, %c0_6] : memref<128x128xbf16, #tpu.memory_space<vmem>>, vector<128x128xbf16>
    %cst_7 = arith.constant dense<0.000000e+00> : vector<8x128xf32>
    %82 = tpu.matmul %80, %81, %cst_7 {dimension_numbers = #tpu.dot_dimension_numbers<[1], [0], [0], [1], [0, 0, 1, 1], [], []>} : vector<8x128xbf16>, vector<128x128xbf16>, vector<8x128xf32> -> vector<8x128xf32>
    %83 = vector.broadcast %79 : vector<8x1xf32> to vector<8x128xf32>
    %84 = arith.divf %82, %83 : vector<8x128xf32>
    %85 = arith.truncf %84 : vector<8x128xf32> to vector<8x128xbf16>
    %c0_8 = arith.constant 0 : index
    %c0_9 = arith.constant 0 : index
    %86 = vector.load %arg4[%c0_8, %c0_9] : memref<128x128xbf16, #tpu.memory_space<vmem>>, vector<128x128xbf16>
    %cst_10 = arith.constant dense<0.000000e+00> : vector<8x128xf32>
    %87 = tpu.matmul %85, %86, %cst_10 {dimension_numbers = #tpu.dot_dimension_numbers<[1], [0], [0], [1], [0, 0, 1, 1], [], []>} : vector<8x128xbf16>, vector<128x128xbf16>, vector<8x128xf32> -> vector<8x128xf32>
    %c0_11 = arith.constant 0 : index
    %c0_12 = arith.constant 0 : index
    %88 = vector.load %arg5[%c0_11, %c0_12] : memref<1x128xf32, #tpu.memory_space<vmem>>, vector<1x128xf32>
    %89 = vector.broadcast %88 : vector<1x128xf32> to vector<8x128xf32>
    %90 = arith.addf %87, %89 : vector<8x128xf32>
    %91 = math.tanh %90 : vector<8x128xf32>
    %92 = arith.truncf %91 : vector<8x128xf32> to vector<8x128xbf16>
    %c0_13 = arith.constant 0 : index
    %c0_14 = arith.constant 0 : index
    %93 = vector.load %arg6[%c0_13, %c0_14] : memref<128x128xbf16, #tpu.memory_space<vmem>>, vector<128x128xbf16>
    %cst_15 = arith.constant dense<0.000000e+00> : vector<8x128xf32>
    %94 = tpu.matmul %92, %93, %cst_15 {dimension_numbers = #tpu.dot_dimension_numbers<[1], [0], [0], [1], [0, 0, 1, 1], [], []>} : vector<8x128xbf16>, vector<128x128xbf16>, vector<8x128xf32> -> vector<8x128xf32>
    %c0_16 = arith.constant 0 : index
    %c0_17 = arith.constant 0 : index
    %95 = vector.load %arg7[%c0_16, %c0_17] : memref<1x128xf32, #tpu.memory_space<vmem>>, vector<1x128xf32>
    %96 = vector.broadcast %95 : vector<1x128xf32> to vector<8x128xf32>
    %97 = arith.addf %94, %96 : vector<8x128xf32>
    %98 = math.tanh %97 : vector<8x128xf32>
    %99 = arith.truncf %98 : vector<8x128xf32> to vector<8x128xbf16>
    %c0_18 = arith.constant 0 : index
    %c0_19 = arith.constant 0 : index
    %100 = vector.load %arg8[%c0_18, %c0_19] : memref<128x128xbf16, #tpu.memory_space<vmem>>, vector<128x128xbf16>
    %cst_20 = arith.constant dense<0.000000e+00> : vector<8x128xf32>
    %101 = tpu.matmul %99, %100, %cst_20 {dimension_numbers = #tpu.dot_dimension_numbers<[1], [0], [0], [1], [0, 0, 1, 1], [], []>} : vector<8x128xbf16>, vector<128x128xbf16>, vector<8x128xf32> -> vector<8x128xf32>
    %c0_21 = arith.constant 0 : index
    %c0_22 = arith.constant 0 : index
    %102 = vector.load %arg9[%c0_21, %c0_22] : memref<1x128xf32, #tpu.memory_space<vmem>>, vector<1x128xf32>
    %103 = vector.broadcast %102 : vector<1x128xf32> to vector<8x128xf32>
    %104 = arith.addf %101, %103 : vector<8x128xf32>
    %c0_23 = arith.constant 0 : index
    %c0_24 = arith.constant 0 : index
    %105 = vector.load %arg10[%c0_23, %c0_24] : memref<8x128xf32, #tpu.memory_space<vmem>>, vector<8x128xf32>
    tpu.vector_store %arg10[%c0_23, %c0_24], %104 {strides = array<i32>} : memref<8x128xf32, #tpu.memory_space<vmem>>, vector<8x128xf32>,
    return
  }
  func.func @transform_0(%arg0: i32) -> (i32, i32) {
    %c0_i32 = arith.constant 0 : i32
    %c0_i32_0 = arith.constant 0 : i32
    return %arg0, %c0_i32 : i32, i32
  }
  func.func @transform_1(%arg0: i32) -> (i32, i32) {
    %c0_i32 = arith.constant 0 : i32
    %c0_i32_0 = arith.constant 0 : i32
    return %arg0, %c0_i32 : i32, i32
  }
  func.func @transform_2(%arg0: i32) -> (i32, i32) {
    %c0_i32 = arith.constant 0 : i32
    %c0_i32_0 = arith.constant 0 : i32
    %c0_i32_1 = arith.constant 0 : i32
    return %c0_i32, %c0_i32_0 : i32, i32
  }
  func.func @transform_3(%arg0: i32) -> (i32, i32) {
    %c0_i32 = arith.constant 0 : i32
    %c0_i32_0 = arith.constant 0 : i32
    %c0_i32_1 = arith.constant 0 : i32
    return %c0_i32, %c0_i32_0 : i32, i32
  }
  func.func @transform_4(%arg0: i32) -> (i32, i32) {
    %c0_i32 = arith.constant 0 : i32
    %c0_i32_0 = arith.constant 0 : i32
    %c0_i32_1 = arith.constant 0 : i32
    return %c0_i32, %c0_i32_0 : i32, i32
  }
  func.func @transform_5(%arg0: i32) -> (i32, i32) {
    %c0_i32 = arith.constant 0 : i32
    %c0_i32_0 = arith.constant 0 : i32
    %c0_i32_1 = arith.constant 0 : i32
    return %c0_i32, %c0_i32_0 : i32, i32
  }
  func.func @transform_6(%arg0: i32) -> (i32, i32) {
    %c0_i32 = arith.constant 0 : i32
    %c0_i32_0 = arith.constant 0 : i32
    %c0_i32_1 = arith.constant 0 : i32
    return %c0_i32, %c0_i32_0 : i32, i32
  }
  func.func @transform_7(%arg0: i32) -> (i32, i32) {
    %c0_i32 = arith.constant 0 : i32
    %c0_i32_0 = arith.constant 0 : i32
    %c0_i32_1 = arith.constant 0 : i32
    return %c0_i32, %c0_i32_0 : i32, i32
  }
  func.func @transform_8(%arg0: i32) -> (i32, i32) {
    %c0_i32 = arith.constant 0 : i32
    %c0_i32_0 = arith.constant 0 : i32
    %c0_i32_1 = arith.constant 0 : i32
    return %c0_i32, %c0_i32_0 : i32, i32
  }
  func.func @transform_9(%arg0: i32) -> (i32, i32) {
    %c0_i32 = arith.constant 0 : i32
    %c0_i32_0 = arith.constant 0 : i32
    return %arg0, %c0_i32 : i32, i32
  }
}

</mosaic_0001>

<llo_original>
// kernel: tpu_custom_call.1
$region0: #{tpu_custom_call.1}
  #allocation0 [shape = 'u32[]', space=smem, size = 0x4, offset = 0x4, fixed_abs, tag = 'smem constant byte address 0x4 - core index']
  #allocation1 [shape = 'u32[144,128]{1,0:T(1,128)}', space=vmem, size = 0x12000, scoped, tag = 'internal scratch']
  %s0 = inlined_call_operand.hbm [shape: s32[8,8], index: 0, kind: input, shape index: {}]
  %s1 = inlined_call_operand.hbm [shape: f32[8,8], index: 1, kind: input, shape index: {}]
  %s2 = inlined_call_operand.hbm [shape: bf16[128,128], index: 2, kind: input, shape index: {}]
  %s3 = inlined_call_operand.hbm [shape: bf16[128,128], index: 3, kind: input, shape index: {}]
  %s4 = inlined_call_operand.vmem [shape: f32[1,128], index: 4, kind: input, shape index: {}]
  %s5 = inlined_call_operand.hbm [shape: bf16[128,128], index: 5, kind: input, shape index: {}]
  %s6 = inlined_call_operand.vmem [shape: f32[1,128], index: 6, kind: input, shape index: {}]
  %s7 = inlined_call_operand.hbm [shape: bf16[128,128], index: 7, kind: input, shape index: {}]
  %s8 = inlined_call_operand.vmem [shape: f32[1,128], index: 8, kind: input, shape index: {}]
  %s9 = inlined_call_operand.hbm [shape: f32[8,128], index: 9, kind: output, shape index: {}]
  %s10 = sld [smem:[#allocation0]]
  $region70: #{tpu_custom_call.1} parent=0
    _
  %s12 = ssub.s32 1, %s10
  %s13 = scalar_select 0, %s12, %s10
  $region1: #{tpu_custom_call.1} parent=0
    #allocation2 [shape = 'u8[4096]{0}', space=vmem, size = 0x1000, scoped, tag = 'input window, operand 0, single buffered']
    #allocation3 [shape = 's32[1]{0}', space=sflag, size = 0x4, scoped, tag = 'scoped memory for tpu_custom_call.1']
    #allocation4 [shape = 's32[1]{0}', space=sflag, size = 0x4, scoped, tag = 'scoped memory for tpu_custom_call.1']
    #allocation5 [shape = 'u8[4096]{0}', space=vmem, size = 0x1000, scoped, tag = 'input window, operand 1, single buffered']
    #allocation6 [shape = 's32[1]{0}', space=sflag, size = 0x4, scoped, tag = 'scoped memory for tpu_custom_call.1']
    #allocation7 [shape = 'u8[32768]{0}', space=vmem, size = 0x8000, scoped, tag = 'input window, operand 2, single buffered']
    #allocation8 [shape = 'u8[32768]{0}', space=vmem, size = 0x8000, scoped, tag = 'input window, operand 3, single buffered']
    #allocation9 [shape = 's32[1]{0}', space=sflag, size = 0x4, scoped, tag = 'scoped memory for tpu_custom_call.1']
    #allocation10 [shape = 'u8[32768]{0}', space=vmem, size = 0x8000, scoped, tag = 'input window, operand 5, single buffered']
    #allocation11 [shape = 'u8[32768]{0}', space=vmem, size = 0x8000, scoped, tag = 'input window, operand 7, single buffered']
    #allocation12 [shape = 's32[1]{0}', space=sflag, size = 0x4, scoped, tag = 'scoped memory for tpu_custom_call.1']
    #allocation13 [shape = 'u8[4096]{0}', space=vmem, size = 0x1000, scoped, tag = 'output window, operand 0, single buffered']
    %14 = vsyncpa [#allocation3], 0
    %15 = vsyncpa [#allocation6], 0
    %16 = vsyncpa [#allocation9], 0
    %17 = vsyncpa [#allocation12], 0
    %18 = vsyncpa [#allocation4], 0
    // Predicated region
    $region2: #{tpu_custom_call.1} parent=1 // pred_check
      _
    $region3: #{tpu_custom_call.1} parent=1 // pred_check_branch
      %20 = sbr.rel (0) target = $region5
    $region4: #{tpu_custom_call.1} parent=1 // pred_region
      %s22 = ssub.s32 128, 128
      %23 = vsyncadd [#allocation3], %s22
      %s25 = sshll.u32 [#allocation2], 4
      %s26 = int_to_ptr.vmem [resolvable:$true] %s25
      %28 = dma.hbm_to_vmem [thread:$0]  %s0, 128, %s26, [#allocation3]
    $region5: #{tpu_custom_call.1} parent=1 // pred_fallthru
      _
    // Predicated region
    $region6: #{tpu_custom_call.1} parent=1 // pred_check
      _
    $region7: #{tpu_custom_call.1} parent=1 // pred_check_branch
      %30 = sbr.rel (0) target = $region9
    $region8: #{tpu_custom_call.1} parent=1 // pred_region
      %s32 = ssub.s32 128, 128
      %33 = vsyncadd [#allocation6], %s32
      %s35 = sshll.u32 [#allocation5], 4
      %s36 = int_to_ptr.vmem [resolvable:$true] %s35
      %38 = dma.hbm_to_vmem [thread:$0]  %s1, 128, %s36, [#allocation6]
    $region9: #{tpu_custom_call.1} parent=1 // pred_fallthru
      _
    // Predicated region
    $region10: #{tpu_custom_call.1} parent=1 // pred_check
      _
    $region11: #{tpu_custom_call.1} parent=1 // pred_check_branch
      %40 = sbr.rel (0) target = $region13
    $region12: #{tpu_custom_call.1} parent=1 // pred_region
      %s42 = ssub.s32 1024, 1024
      %43 = vsyncadd [#allocation6], %s42
      %s44 = sshll.u32 [#allocation7], 4
      %s45 = int_to_ptr.vmem [resolvable:$true] %s44
      %50 = dma.hbm_to_vmem [thread:$0]  %s2, 1024, %s45, [#allocation6], 64, 64, 4
    $region13: #{tpu_custom_call.1} parent=1 // pred_fallthru
      _
    // Predicated region
    $region14: #{tpu_custom_call.1} parent=1 // pred_check
      _
    $region15: #{tpu_custom_call.1} parent=1 // pred_check_branch
      %52 = sbr.rel (0) target = $region17
    $region16: #{tpu_custom_call.1} parent=1 // pred_region
      %s54 = ssub.s32 1024, 1024
      %55 = vsyncadd [#allocation9], %s54
      %s56 = sshll.u32 [#allocation8], 4
      %s57 = int_to_ptr.vmem [resolvable:$true] %s56
      %62 = dma.hbm_to_vmem [thread:$0]  %s3, 1024, %s57, [#allocation9], 64, 64, 4
    $region17: #{tpu_custom_call.1} parent=1 // pred_fallthru
      _
    // Predicated region
    $region18: #{tpu_custom_call.1} parent=1 // pred_check
      _
    $region19: #{tpu_custom_call.1} parent=1 // pred_check_branch
      %64 = sbr.rel (0) target = $region21
    $region20: #{tpu_custom_call.1} parent=1 // pred_region
      _
    $region21: #{tpu_custom_call.1} parent=1 // pred_fallthru
      _
    // Predicated region
    $region22: #{tpu_custom_call.1} parent=1 // pred_check
      _
    $region23: #{tpu_custom_call.1} parent=1 // pred_check_branch
      %66 = sbr.rel (0) target = $region25
    $region24: #{tpu_custom_call.1} parent=1 // pred_region
      %s68 = ssub.s32 1024, 1024
      %69 = vsyncadd [#allocation9], %s68
      %s70 = sshll.u32 [#allocation10], 4
      %s71 = int_to_ptr.vmem [resolvable:$true] %s70
      %76 = dma.hbm_to_vmem [thread:$0]  %s5, 1024, %s71, [#allocation9], 64, 64, 4
    $region25: #{tpu_custom_call.1} parent=1 // pred_fallthru
      _
    // Predicated region
    $region26: #{tpu_custom_call.1} parent=1 // pred_check
      _
    $region27: #{tpu_custom_call.1} parent=1 // pred_check_branch
      %78 = sbr.rel (0) target = $region29
    $region28: #{tpu_custom_call.1} parent=1 // pred_region
      _
    $region29: #{tpu_custom_call.1} parent=1 // pred_fallthru
      _
    // Predicated region
    $region30: #{tpu_custom_call.1} parent=1 // pred_check
      _
    $region31: #{tpu_custom_call.1} parent=1 // pred_check_branch
      %80 = sbr.rel (0) target = $region33
    $region32: #{tpu_custom_call.1} parent=1 // pred_region
      %s82 = ssub.s32 1024, 1024
      %83 = vsyncadd [#allocation12], %s82
      %s84 = sshll.u32 [#allocation11], 4
      %s85 = int_to_ptr.vmem [resolvable:$true] %s84
      %90 = dma.hbm_to_vmem [thread:$0]  %s7, 1024, %s85, [#allocation12], 64, 64, 4
    $region33: #{tpu_custom_call.1} parent=1 // pred_fallthru
      _
    // Predicated region
    $region34: #{tpu_custom_call.1} parent=1 // pred_check
      _
    $region35: #{tpu_custom_call.1} parent=1 // pred_check_branch
      %92 = sbr.rel (0) target = $region37
    $region36: #{tpu_custom_call.1} parent=1 // pred_region
      _
    $region37: #{tpu_custom_call.1} parent=1 // pred_fallthru
      _
    // Predicated region
    $region38: #{tpu_custom_call.1} parent=1 // pred_check
      _
    $region39: #{tpu_custom_call.1} parent=1 // pred_check_branch
      %94 = sbr.rel (0) target = $region41
    $region40: #{tpu_custom_call.1} parent=1 // pred_region
      %95 = dma.done [#allocation3], 128
    $region41: #{tpu_custom_call.1} parent=1 // pred_fallthru
      _
    // Predicated region
    $region42: #{tpu_custom_call.1} parent=1 // pred_check
      _
    $region43: #{tpu_custom_call.1} parent=1 // pred_check_branch
      %97 = sbr.rel (0) target = $region45
    $region44: #{tpu_custom_call.1} parent=1 // pred_region
      %98 = dma.done [#allocation6], 128
    $region45: #{tpu_custom_call.1} parent=1 // pred_fallthru
      _
    // Predicated region
    $region46: #{tpu_custom_call.1} parent=1 // pred_check
      _
    $region47: #{tpu_custom_call.1} parent=1 // pred_check_branch
      %100 = sbr.rel (0) target = $region49
    $region48: #{tpu_custom_call.1} parent=1 // pred_region
      %101 = dma.done [#allocation6], 1024
    $region49: #{tpu_custom_call.1} parent=1 // pred_fallthru
      _
    // Predicated region
    $region50: #{tpu_custom_call.1} parent=1 // pred_check
      _
    $region51: #{tpu_custom_call.1} parent=1 // pred_check_branch
      %103 = sbr.rel (0) target = $region53
    $region52: #{tpu_custom_call.1} parent=1 // pred_region
      %104 = dma.done [#allocation9], 1024
    $region53: #{tpu_custom_call.1} parent=1 // pred_fallthru
      _
    // Predicated region
    $region54: #{tpu_custom_call.1} parent=1 // pred_check
      _
    $region55: #{tpu_custom_call.1} parent=1 // pred_check_branch
      %106 = sbr.rel (0) target = $region57
    $region56: #{tpu_custom_call.1} parent=1 // pred_region
      %107 = dma.done [#allocation9], 1024
    $region57: #{tpu_custom_call.1} parent=1 // pred_fallthru
      _
    // Predicated region
    $region58: #{tpu_custom_call.1} parent=1 // pred_check
      _
    $region59: #{tpu_custom_call.1} parent=1 // pred_check_branch
      %109 = sbr.rel (0) target = $region61
    $region60: #{tpu_custom_call.1} parent=1 // pred_region
      %110 = dma.done [#allocation12], 1024
    $region61: #{tpu_custom_call.1} parent=1 // pred_fallthru
      _
    %v112 = vld [vmem:[#allocation2] sm:$0xff]
    %v113 = vld [vmem:[#allocation5] sm:$0xff]
    %v114 = vlaneseq
    %v115 = vand.u32 %v114, 127
    %116 = vset.pattern.permute.xlu0 0
    %117 = vperm.xlu0 %116, %v112
    %v118 = vpop.permute.xlu0 %117
    %vm119 = vcmp.eq.s32.totalorder %v118, %v115
    %v120 = vsel %vm119, 1, 0
    %v121 = vcvt.s32.f32 %v120
    %123 = vset.pattern.permute.xlu0 0
    %124 = vperm.xlu0 %123, %v113
    %v125 = vpop.permute.xlu0 %124
    %v127 = vmul.f32 %v121, %v125
    %v128 = vadd.f32 %v127, 0.0
    %129 = vset.pattern.permute.xlu0 1
    %130 = vperm.xlu0 %129, %v112
    %v131 = vpop.permute.xlu0 %130
    %vm132 = vcmp.eq.s32.totalorder %v131, %v115
    %v133 = vsel %vm132, 1, 0
    %v134 = vcvt.s32.f32 %v133
    %135 = vset.pattern.permute.xlu0 1
    %136 = vperm.xlu0 %135, %v113
    %v137 = vpop.permute.xlu0 %136
    %v139 = vmul.f32 %v134, %v137
    %v140 = vadd.f32 %v128, %v139
    %141 = vset.pattern.permute.xlu0 2
    %142 = vperm.xlu0 %141, %v112
    %v143 = vpop.permute.xlu0 %142
    %vm144 = vcmp.eq.s32.totalorder %v143, %v115
    %v145 = vsel %vm144, 1, 0
    %v146 = vcvt.s32.f32 %v145
    %147 = vset.pattern.permute.xlu0 2
    %148 = vperm.xlu0 %147, %v113
    %v149 = vpop.permute.xlu0 %148
    %v151 = vmul.f32 %v146, %v149
    %v152 = vadd.f32 %v140, %v151
    %153 = vset.pattern.permute.xlu0 3
    %154 = vperm.xlu0 %153, %v112
    %v155 = vpop.permute.xlu0 %154
    %vm156 = vcmp.eq.s32.totalorder %v155, %v115
    %v157 = vsel %vm156, 1, 0
    %v158 = vcvt.s32.f32 %v157
    %159 = vset.pattern.permute.xlu0 3
    %160 = vperm.xlu0 %159, %v113
    %v161 = vpop.permute.xlu0 %160
    %v163 = vmul.f32 %v158, %v161
    %v164 = vadd.f32 %v152, %v163
    %165 = vset.pattern.permute.xlu0 4
    %166 = vperm.xlu0 %165, %v112
    %v167 = vpop.permute.xlu0 %166
    %vm168 = vcmp.eq.s32.totalorder %v167, %v115
    %v169 = vsel %vm168, 1, 0
    %v170 = vcvt.s32.f32 %v169
    %171 = vset.pattern.permute.xlu0 4
    %172 = vperm.xlu0 %171, %v113
    %v173 = vpop.permute.xlu0 %172
    %v175 = vmul.f32 %v170, %v173
    %v176 = vadd.f32 %v164, %v175
    %177 = vset.pattern.permute.xlu0 5
    %178 = vperm.xlu0 %177, %v112
    %v179 = vpop.permute.xlu0 %178
    %vm180 = vcmp.eq.s32.totalorder %v179, %v115
    %v181 = vsel %vm180, 1, 0
    %v182 = vcvt.s32.f32 %v181
    %183 = vset.pattern.permute.xlu0 5
    %184 = vperm.xlu0 %183, %v113
    %v185 = vpop.permute.xlu0 %184
    %v187 = vmul.f32 %v182, %v185
    %v188 = vadd.f32 %v176, %v187
    %189 = vset.pattern.permute.xlu0 6
    %190 = vperm.xlu0 %189, %v112
    %v191 = vpop.permute.xlu0 %190
    %vm192 = vcmp.eq.s32.totalorder %v191, %v115
    %v193 = vsel %vm192, 1, 0
    %v194 = vcvt.s32.f32 %v193
    %195 = vset.pattern.permute.xlu0 6
    %196 = vperm.xlu0 %195, %v113
    %v197 = vpop.permute.xlu0 %196
    %v199 = vmul.f32 %v194, %v197
    %v200 = vadd.f32 %v188, %v199
    %201 = vset.pattern.permute.xlu0 7
    %202 = vperm.xlu0 %201, %v112
    %v203 = vpop.permute.xlu0 %202
    %vm204 = vcmp.eq.s32.totalorder %v203, %v115
    %v205 = vsel %vm204, 1, 0
    %v206 = vcvt.s32.f32 %v205
    %207 = vset.pattern.permute.xlu0 7
    %208 = vperm.xlu0 %207, %v113
    %v209 = vpop.permute.xlu0 %208
    %v211 = vmul.f32 %v206, %v209
    %v212 = vadd.f32 %v200, %v211
    %vm213 = vcmask 64512
    %v214 = vsel %vm213, %v113, 0.0
    %215 = vadd.xlane.f32.xlu0 %v214
    %v216 = vpop.xlane.xlu0 %215
    %v217 = vmax.f32 %v216, 1.0
    %v218 = vpack.c.bf16 %v212, %v212
    %v219 = vld [vmem:[#allocation7] sm:$0xf]
    %v220 = vld [vmem:[#allocation7 + $0x4] sm:$0xf]
    %v221 = vld [vmem:[#allocation7 + $0x8] sm:$0xf]
    %v222 = vld [vmem:[#allocation7 + $0xc] sm:$0xf]
    %v223 = vld [vmem:[#allocation7 + $0x10] sm:$0xf]
    %v224 = vld [vmem:[#allocation7 + $0x14] sm:$0xf]
    %v225 = vld [vmem:[#allocation7 + $0x18] sm:$0xf]
    %v226 = vld [vmem:[#allocation7 + $0x1c] sm:$0xf]
    %v227 = vld [vmem:[#allocation7 + $0x20] sm:$0xf]
    %v228 = vld [vmem:[#allocation7 + $0x24] sm:$0xf]
    %v229 = vld [vmem:[#allocation7 + $0x28] sm:$0xf]
    %v230 = vld [vmem:[#allocation7 + $0x2c] sm:$0xf]
    %v231 = vld [vmem:[#allocation7 + $0x30] sm:$0xf]
    %v232 = vld [vmem:[#allocation7 + $0x34] sm:$0xf]
    %v233 = vld [vmem:[#allocation7 + $0x38] sm:$0xf]
    %v234 = vld [vmem:[#allocation7 + $0x3c] sm:$0xf]
    %v251 = vunpack.c.l.b16 %v219
    %v252 = vunpack.c.l.b16 %v220
    %v253 = vunpack.c.l.b16 %v221
    %v254 = vunpack.c.l.b16 %v222
    %v255 = vunpack.c.l.b16 %v223
    %v256 = vunpack.c.l.b16 %v224
    %v257 = vunpack.c.l.b16 %v225
    %v258 = vunpack.c.l.b16 %v226
    %v259 = vunpack.c.l.b16 %v227
    %v260 = vunpack.c.l.b16 %v228
    %v261 = vunpack.c.l.b16 %v229
    %v262 = vunpack.c.l.b16 %v230
    %v263 = vunpack.c.l.b16 %v231
    %v264 = vunpack.c.l.b16 %v232
    %v265 = vunpack.c.l.b16 %v233
    %v266 = vunpack.c.l.b16 %v234
    %v267 = vpack.c.b16 %v252, %v251
    %v268 = vpack.c.b16 %v254, %v253
    %v269 = vpack.c.b16 %v256, %v255
    %v270 = vpack.c.b16 %v258, %v257
    %v271 = vpack.c.b16 %v260, %v259
    %v272 = vpack.c.b16 %v262, %v261
    %v273 = vpack.c.b16 %v264, %v263
    %v274 = vpack.c.b16 %v266, %v265
    %283 = vmatprep.subr.bf16.mxu0 0
    %284 = vmatpush1.bf16.msra.mxu0 %v267
    %285 = vmatprep.subr.bf16.mxu0 0
    %286 = vmatpush1.bf16.msra.mxu0 %v268
    %287 = vmatprep.subr.bf16.mxu0 0
    %288 = vmatpush1.bf16.msra.mxu0 %v269
    %289 = vmatprep.subr.bf16.mxu0 0
    %290 = vmatpush1.bf16.msra.mxu0 %v270
    %291 = vmatprep.subr.bf16.mxu0 0
    %292 = vmatpush1.bf16.msra.mxu0 %v271
    %293 = vmatprep.subr.bf16.mxu0 0
    %294 = vmatpush1.bf16.msra.mxu0 %v272
    %295 = vmatprep.subr.bf16.mxu0 0
    %296 = vmatpush1.bf16.msra.mxu0 %v273
    %297 = vmatprep.subr.bf16.mxu0 0
    %298 = vmatpush1.bf16.msra.mxu0 %v274
    %299 = vmatprep.subr.bf16.mxu0 0
    %300 = vmatpush1.bf16.msra.mxu0 0
    %301 = vmatprep.subr.bf16.mxu0 0
    %302 = vmatpush1.bf16.msra.mxu0 0
    %303 = vmatprep.subr.bf16.mxu0 0
    %304 = vmatpush1.bf16.msra.mxu0 0
    %305 = vmatprep.subr.bf16.mxu0 0
    %306 = vmatpush1.bf16.msra.mxu0 0
    %307 = vmatprep.subr.bf16.mxu0 0
    %308 = vmatpush1.bf16.msra.mxu0 0
    %309 = vmatprep.subr.bf16.mxu0 0
    %310 = vmatpush1.bf16.msra.mxu0 0
    %311 = vmatprep.subr.bf16.mxu0 0
    %312 = vmatpush1.bf16.msra.mxu0 0
    %313 = vmatprep.subr.bf16.mxu0 0
    %314 = vmatpush1.bf16.msra.mxu0 0
    %315 = vmatprep.mubr.bf16.mxu0 0
    %316 = vmatmul.mubr.bf16.gmra.mrb[0].mxu0 %v218
    %v317 = vpop.f32.mrb[0].mxu0
    %v318 = vadd.f32 0.0, %v317
    %v319 = vpop.f32.mrb[0].mxu0
    %v320 = vpop.f32.mrb[0].mxu0
    %v321 = vpop.f32.mrb[0].mxu0
    %322 = vdwg.mxu0
    %v323 = vrcp.pop %v217
    %v324 = vmul.f32 %v318, %v323
    %v325 = vpack.c.bf16 %v324, %v324
    %v326 = vld [vmem:[#allocation8] sm:$0xf]
    %v327 = vld [vmem:[#allocation8 + $0x4] sm:$0xf]
    %v328 = vld [vmem:[#allocation8 + $0x8] sm:$0xf]
    %v329 = vld [vmem:[#allocation8 + $0xc] sm:$0xf]
    %v330 = vld [vmem:[#allocation8 + $0x10] sm:$0xf]
    %v331 = vld [vmem:[#allocation8 + $0x14] sm:$0xf]
    %v332 = vld [vmem:[#allocation8 + $0x18] sm:$0xf]
    %v333 = vld [vmem:[#allocation8 + $0x1c] sm:$0xf]
    %v334 = vld [vmem:[#allocation8 + $0x20] sm:$0xf]
    %v335 = vld [vmem:[#allocation8 + $0x24] sm:$0xf]
    %v336 = vld [vmem:[#allocation8 + $0x28] sm:$0xf]
    %v337 = vld [vmem:[#allocation8 + $0x2c] sm:$0xf]
    %v338 = vld [vmem:[#allocation8 + $0x30] sm:$0xf]
    %v339 = vld [vmem:[#allocation8 + $0x34] sm:$0xf]
    %v340 = vld [vmem:[#allocation8 + $0x38] sm:$0xf]
    %v341 = vld [vmem:[#allocation8 + $0x3c] sm:$0xf]
    %v342 = vld [vmem:[%s4] sm:$0x1]
    %v344 = vlaneseq
    %v345 = vshrl.u32 %v344, 7
    %v346 = vsub.s32 0, %v345
    %v347 = vrot.slane %v342, %v346
    %v365 = vunpack.c.l.b16 %v326
    %v366 = vunpack.c.l.b16 %v327
    %v367 = vunpack.c.l.b16 %v328
    %v368 = vunpack.c.l.b16 %v329
    %v369 = vunpack.c.l.b16 %v330
    %v370 = vunpack.c.l.b16 %v331
    %v371 = vunpack.c.l.b16 %v332
    %v372 = vunpack.c.l.b16 %v333
    %v373 = vunpack.c.l.b16 %v334
    %v374 = vunpack.c.l.b16 %v335
    %v375 = vunpack.c.l.b16 %v336
    %v376 = vunpack.c.l.b16 %v337
    %v377 = vunpack.c.l.b16 %v338
    %v378 = vunpack.c.l.b16 %v339
    %v379 = vunpack.c.l.b16 %v340
    %v380 = vunpack.c.l.b16 %v341
    %v381 = vpack.c.b16 %v366, %v365
    %v382 = vpack.c.b16 %v368, %v367
    %v383 = vpack.c.b16 %v370, %v369
    %v384 = vpack.c.b16 %v372, %v371
    %v385 = vpack.c.b16 %v374, %v373
    %v386 = vpack.c.b16 %v376, %v375
    %v387 = vpack.c.b16 %v378, %v377
    %v388 = vpack.c.b16 %v380, %v379
    %397 = vmatprep.subr.bf16.mxu0 0
    %398 = vmatpush1.bf16.msra.mxu0 %v381
    %399 = vmatprep.subr.bf16.mxu0 0
    %400 = vmatpush1.bf16.msra.mxu0 %v382
    %401 = vmatprep.subr.bf16.mxu0 0
    %402 = vmatpush1.bf16.msra.mxu0 %v383
    %403 = vmatprep.subr.bf16.mxu0 0
    %404 = vmatpush1.bf16.msra.mxu0 %v384
    %405 = vmatprep.subr.bf16.mxu0 0
    %406 = vmatpush1.bf16.msra.mxu0 %v385
    %407 = vmatprep.subr.bf16.mxu0 0
    %408 = vmatpush1.bf16.msra.mxu0 %v386
    %409 = vmatprep.subr.bf16.mxu0 0
    %410 = vmatpush1.bf16.msra.mxu0 %v387
    %411 = vmatprep.subr.bf16.mxu0 0
    %412 = vmatpush1.bf16.msra.mxu0 %v388
    %413 = vmatprep.subr.bf16.mxu0 0
    %414 = vmatpush1.bf16.msra.mxu0 0
    %415 = vmatprep.subr.bf16.mxu0 0
    %416 = vmatpush1.bf16.msra.mxu0 0
    %417 = vmatprep.subr.bf16.mxu0 0
    %418 = vmatpush1.bf16.msra.mxu0 0
    %419 = vmatprep.subr.bf16.mxu0 0
    %420 = vmatpush1.bf16.msra.mxu0 0
    %421 = vmatprep.subr.bf16.mxu0 0
    %422 = vmatpush1.bf16.msra.mxu0 0
    %423 = vmatprep.subr.bf16.mxu0 0
    %424 = vmatpush1.bf16.msra.mxu0 0
    %425 = vmatprep.subr.bf16.mxu0 0
    %426 = vmatpush1.bf16.msra.mxu0 0
    %427 = vmatprep.subr.bf16.mxu0 0
    %428 = vmatpush1.bf16.msra.mxu0 0
    %429 = vmatprep.mubr.bf16.mxu0 0
    %430 = vmatmul.mubr.bf16.gmra.mrb[0].mxu0 %v325
    %v431 = vpop.f32.mrb[0].mxu0
    %v432 = vadd.f32 %v347, %v431
    %v433 = vpop.f32.mrb[0].mxu0
    %v434 = vpop.f32.mrb[0].mxu0
    %v435 = vpop.f32.mrb[0].mxu0
    %436 = vdwg.mxu0
    %v437 = vtanh.pop %v432
    %v438 = vpack.c.bf16 %v437, %v437
    %v439 = vld [vmem:[#allocation10] sm:$0xf]
    %v440 = vld [vmem:[#allocation10 + $0x4] sm:$0xf]
    %v441 = vld [vmem:[#allocation10 + $0x8] sm:$0xf]
    %v442 = vld [vmem:[#allocation10 + $0xc] sm:$0xf]
    %v443 = vld [vmem:[#allocation10 + $0x10] sm:$0xf]
    %v444 = vld [vmem:[#allocation10 + $0x14] sm:$0xf]
    %v445 = vld [vmem:[#allocation10 + $0x18] sm:$0xf]
    %v446 = vld [vmem:[#allocation10 + $0x1c] sm:$0xf]
    %v447 = vld [vmem:[#allocation10 + $0x20] sm:$0xf]
    %v448 = vld [vmem:[#allocation10 + $0x24] sm:$0xf]
    %v449 = vld [vmem:[#allocation10 + $0x28] sm:$0xf]
    %v450 = vld [vmem:[#allocation10 + $0x2c] sm:$0xf]
    %v451 = vld [vmem:[#allocation10 + $0x30] sm:$0xf]
    %v452 = vld [vmem:[#allocation10 + $0x34] sm:$0xf]
    %v453 = vld [vmem:[#allocation10 + $0x38] sm:$0xf]
    %v454 = vld [vmem:[#allocation10 + $0x3c] sm:$0xf]
    %v455 = vld [vmem:[%s6] sm:$0x1]
    %v457 = vlaneseq
    %v458 = vshrl.u32 %v457, 7
    %v459 = vsub.s32 0, %v458
    %v460 = vrot.slane %v455, %v459
    %v478 = vunpack.c.l.b16 %v439
    %v479 = vunpack.c.l.b16 %v440
    %v480 = vunpack.c.l.b16 %v441
    %v481 = vunpack.c.l.b16 %v442
    %v482 = vunpack.c.l.b16 %v443
    %v483 = vunpack.c.l.b16 %v444
    %v484 = vunpack.c.l.b16 %v445
    %v485 = vunpack.c.l.b16 %v446
    %v486 = vunpack.c.l.b16 %v447
    %v487 = vunpack.c.l.b16 %v448
    %v488 = vunpack.c.l.b16 %v449
    %v489 = vunpack.c.l.b16 %v450
    %v490 = vunpack.c.l.b16 %v451
    %v491 = vunpack.c.l.b16 %v452
    %v492 = vunpack.c.l.b16 %v453
    %v493 = vunpack.c.l.b16 %v454
    %v494 = vpack.c.b16 %v479, %v478
    %v495 = vpack.c.b16 %v481, %v480
    %v496 = vpack.c.b16 %v483, %v482
    %v497 = vpack.c.b16 %v485, %v484
    %v498 = vpack.c.b16 %v487, %v486
    %v499 = vpack.c.b16 %v489, %v488
    %v500 = vpack.c.b16 %v491, %v490
    %v501 = vpack.c.b16 %v493, %v492
    %510 = vmatprep.subr.bf16.mxu0 0
    %511 = vmatpush1.bf16.msra.mxu0 %v494
    %512 = vmatprep.subr.bf16.mxu0 0
    %513 = vmatpush1.bf16.msra.mxu0 %v495
    %514 = vmatprep.subr.bf16.mxu0 0
    %515 = vmatpush1.bf16.msra.mxu0 %v496
    %516 = vmatprep.subr.bf16.mxu0 0
    %517 = vmatpush1.bf16.msra.mxu0 %v497
    %518 = vmatprep.subr.bf16.mxu0 0
    %519 = vmatpush1.bf16.msra.mxu0 %v498
    %520 = vmatprep.subr.bf16.mxu0 0
    %521 = vmatpush1.bf16.msra.mxu0 %v499
    %522 = vmatprep.subr.bf16.mxu0 0
    %523 = vmatpush1.bf16.msra.mxu0 %v500
    %524 = vmatprep.subr.bf16.mxu0 0
    %525 = vmatpush1.bf16.msra.mxu0 %v501
    %526 = vmatprep.subr.bf16.mxu0 0
    %527 = vmatpush1.bf16.msra.mxu0 0
    %528 = vmatprep.subr.bf16.mxu0 0
    %529 = vmatpush1.bf16.msra.mxu0 0
    %530 = vmatprep.subr.bf16.mxu0 0
    %531 = vmatpush1.bf16.msra.mxu0 0
    %532 = vmatprep.subr.bf16.mxu0 0
    %533 = vmatpush1.bf16.msra.mxu0 0
    %534 = vmatprep.subr.bf16.mxu0 0
    %535 = vmatpush1.bf16.msra.mxu0 0
    %536 = vmatprep.subr.bf16.mxu0 0
    %537 = vmatpush1.bf16.msra.mxu0 0
    %538 = vmatprep.subr.bf16.mxu0 0
    %539 = vmatpush1.bf16.msra.mxu0 0
    %540 = vmatprep.subr.bf16.mxu0 0
    %541 = vmatpush1.bf16.msra.mxu0 0
    %542 = vmatprep.mubr.bf16.mxu0 0
    %543 = vmatmul.mubr.bf16.gmra.mrb[0].mxu0 %v438
    %v544 = vpop.f32.mrb[0].mxu0
    %v545 = vadd.f32 %v460, %v544
    %v546 = vpop.f32.mrb[0].mxu0
    %v547 = vpop.f32.mrb[0].mxu0
    %v548 = vpop.f32.mrb[0].mxu0
    %549 = vdwg.mxu0
    %v550 = vtanh.pop %v545
    %v551 = vpack.c.bf16 %v550, %v550
    %v552 = vld [vmem:[#allocation11] sm:$0xf]
    %v553 = vld [vmem:[#allocation11 + $0x4] sm:$0xf]
    %v554 = vld [vmem:[#allocation11 + $0x8] sm:$0xf]
    %v555 = vld [vmem:[#allocation11 + $0xc] sm:$0xf]
    %v556 = vld [vmem:[#allocation11 + $0x10] sm:$0xf]
    %v557 = vld [vmem:[#allocation11 + $0x14] sm:$0xf]
    %v558 = vld [vmem:[#allocation11 + $0x18] sm:$0xf]
    %v559 = vld [vmem:[#allocation11 + $0x1c] sm:$0xf]
    %v560 = vld [vmem:[#allocation11 + $0x20] sm:$0xf]
    %v561 = vld [vmem:[#allocation11 + $0x24] sm:$0xf]
    %v562 = vld [vmem:[#allocation11 + $0x28] sm:$0xf]
    %v563 = vld [vmem:[#allocation11 + $0x2c] sm:$0xf]
    %v564 = vld [vmem:[#allocation11 + $0x30] sm:$0xf]
    %v565 = vld [vmem:[#allocation11 + $0x34] sm:$0xf]
    %v566 = vld [vmem:[#allocation11 + $0x38] sm:$0xf]
    %v567 = vld [vmem:[#allocation11 + $0x3c] sm:$0xf]
    %v568 = vld [vmem:[%s8] sm:$0x1]
    %v570 = vlaneseq
    %v571 = vshrl.u32 %v570, 7
    %v572 = vsub.s32 0, %v571
    %v573 = vrot.slane %v568, %v572
    %v591 = vunpack.c.l.b16 %v552
    %v592 = vunpack.c.l.b16 %v553
    %v593 = vunpack.c.l.b16 %v554
    %v594 = vunpack.c.l.b16 %v555
    %v595 = vunpack.c.l.b16 %v556
    %v596 = vunpack.c.l.b16 %v557
    %v597 = vunpack.c.l.b16 %v558
    %v598 = vunpack.c.l.b16 %v559
    %v599 = vunpack.c.l.b16 %v560
    %v600 = vunpack.c.l.b16 %v561
    %v601 = vunpack.c.l.b16 %v562
    %v602 = vunpack.c.l.b16 %v563
    %v603 = vunpack.c.l.b16 %v564
    %v604 = vunpack.c.l.b16 %v565
    %v605 = vunpack.c.l.b16 %v566
    %v606 = vunpack.c.l.b16 %v567
    %v607 = vpack.c.b16 %v592, %v591
    %v608 = vpack.c.b16 %v594, %v593
    %v609 = vpack.c.b16 %v596, %v595
    %v610 = vpack.c.b16 %v598, %v597
    %v611 = vpack.c.b16 %v600, %v599
    %v612 = vpack.c.b16 %v602, %v601
    %v613 = vpack.c.b16 %v604, %v603
    %v614 = vpack.c.b16 %v606, %v605
    %623 = vmatprep.subr.bf16.mxu0 0
    %624 = vmatpush1.bf16.msra.mxu0 %v607
    %625 = vmatprep.subr.bf16.mxu0 0
    %626 = vmatpush1.bf16.msra.mxu0 %v608
    %627 = vmatprep.subr.bf16.mxu0 0
    %628 = vmatpush1.bf16.msra.mxu0 %v609
    %629 = vmatprep.subr.bf16.mxu0 0
    %630 = vmatpush1.bf16.msra.mxu0 %v610
    %631 = vmatprep.subr.bf16.mxu0 0
    %632 = vmatpush1.bf16.msra.mxu0 %v611
    %633 = vmatprep.subr.bf16.mxu0 0
    %634 = vmatpush1.bf16.msra.mxu0 %v612
    %635 = vmatprep.subr.bf16.mxu0 0
    %636 = vmatpush1.bf16.msra.mxu0 %v613
    %637 = vmatprep.subr.bf16.mxu0 0
    %638 = vmatpush1.bf16.msra.mxu0 %v614
    %639 = vmatprep.subr.bf16.mxu0 0
    %640 = vmatpush1.bf16.msra.mxu0 0
    %641 = vmatprep.subr.bf16.mxu0 0
    %642 = vmatpush1.bf16.msra.mxu0 0
    %643 = vmatprep.subr.bf16.mxu0 0
    %644 = vmatpush1.bf16.msra.mxu0 0
    %645 = vmatprep.subr.bf16.mxu0 0
    %646 = vmatpush1.bf16.msra.mxu0 0
    %647 = vmatprep.subr.bf16.mxu0 0
    %648 = vmatpush1.bf16.msra.mxu0 0
    %649 = vmatprep.subr.bf16.mxu0 0
    %650 = vmatpush1.bf16.msra.mxu0 0
    %651 = vmatprep.subr.bf16.mxu0 0
    %652 = vmatpush1.bf16.msra.mxu0 0
    %653 = vmatprep.subr.bf16.mxu0 0
    %654 = vmatpush1.bf16.msra.mxu0 0
    %655 = vmatprep.mubr.bf16.mxu0 0
    %656 = vmatmul.mubr.bf16.gmra.mrb[0].mxu0 %v551
    %v657 = vpop.f32.mrb[0].mxu0
    %v658 = vadd.f32 %v573, %v657
    %v659 = vpop.f32.mrb[0].mxu0
    %v660 = vpop.f32.mrb[0].mxu0
    %v661 = vpop.f32.mrb[0].mxu0
    %662 = vdwg.mxu0
    %663 = vst [vmem:[#allocation13] sm:$0xff] %v658
    // Predicated region
    $region62: #{tpu_custom_call.1} parent=1 // pred_check
      _
    $region63: #{tpu_custom_call.1} parent=1 // pred_check_branch
      %665 = sbr.rel (0) target = $region65
    $region64: #{tpu_custom_call.1} parent=1 // pred_region
      %s667 = ssub.s32 128, 128
      %668 = vsyncadd [#allocation4], %s667
      %s670 = sshll.u32 [#allocation13], 4
      %s671 = int_to_ptr.vmem [resolvable:$true] %s670
      %673 = dma.vmem_to_hbm [thread:$0]  %s671, 128, %s9, [#allocation4]
    $region65: #{tpu_custom_call.1} parent=1 // pred_fallthru
      _
    // Predicated region
    $region66: #{tpu_custom_call.1} parent=1 // pred_check
      _
    $region67: #{tpu_custom_call.1} parent=1 // pred_check_branch
      %675 = sbr.rel (0) target = $region69
    $region68: #{tpu_custom_call.1} parent=1 // pred_region
      %676 = dma.done [#allocation4], 128
    $region69: #{tpu_custom_call.1} parent=1 // pred_fallthru
      _
    %677 = vsyncpa [#allocation3], 1
    %678 = vsyncpa [#allocation6], 1
    %679 = vsyncpa [#allocation9], 1
    %680 = vsyncpa [#allocation12], 1
    %681 = vsyncpa [#allocation4], 1

</llo_original>
